<compile_context>
chip_gen: v5e
topology: v5e:2x2
jax: 0.10.0
libtpu: 0.0.40
codegen_flags: <defaults>
</compile_context>

<pallas_src>
import jax
import jax.numpy as jnp
from jax.experimental import pallas as pl
from jax.experimental.pallas import tpu as pltpu


def _pooler_kernel(x_ref, w_ref, b_ref, o_ref):
    # x_ref: [TB, H]   w_ref: [H, TN]   b_ref: [1, TN]   o_ref: [TB, TN]
    # MXU matmul in the operands' native dtypes, f32 accumulation.
    y = jnp.dot(x_ref[...], w_ref[...], preferred_element_type=jnp.float32)
    y = y + b_ref[...].astype(jnp.float32)            # f32 epilogue on the tile
    o_ref[...] = jnp.tanh(y).astype(o_ref.dtype)      # tanh -> EUP, then downcast


def _vmem_capacity_bytes() -> int:
    """Per-generation VMEM capacity; conservative fallback = v7x (64 MiB/core)."""
    try:
        info = pltpu.get_tpu_info()
        cap = getattr(info, "vmem_capacity_bytes", None)
        if cap:
            return int(cap)
    except Exception:
        pass
    return 64 * 1024 * 1024


def _pick_tn(H: int, w_itemsize: int, vmem_budget: int) -> int:
    """Output-dim (lane) tile.

    Largest lane-dense (multiple-of-128) divisor of H such that the
    double-buffered H x TN weight tile stays within ~half the VMEM budget.
    When H splits into two 128-multiples, TN = H//2 is preferred: exactly two
    N tiles, i.e. one step per TensorCore on v7x and minimal step overhead on
    single-core chips.  Small H falls back to the full (legal) dimension.
    """
    tile_budget = vmem_budget // 2
    candidates = []
    if H % 256 == 0:
        candidates.append(H // 2)
    candidates += [512, 384, 256, 128]
    for tn in candidates:
        if tn < H and H % tn == 0 and 2 * H * tn * w_itemsize <= tile_budget:
            return tn
    return H


def _pick_tb(B: int) -> int:
    """Batch (sublane) tile: multiples of 8 keep blocks legal; small/odd B
    falls back to the full dimension (always a legal block)."""
    for tb in (256, 128, 64, 32, 16, 8):
        if B > tb and B % tb == 0:
            return tb
    return B


def bert_pooler(hidden_states, weight, bias):
    """hidden_states: [B, S, H]; weight: [H_in, H_out]; bias: [H_out] -> [B, H_out]."""
    # CLS-token slice kept in the wrapper (see header comment).
    cls = hidden_states[:, 0, :]                       # [B, H]
    B, H = cls.shape
    bias2d = bias.reshape(1, H)                        # 2-D for TPU layout

    x_isz = jnp.dtype(cls.dtype).itemsize
    w_isz = jnp.dtype(weight.dtype).itemsize
    b_isz = jnp.dtype(bias.dtype).itemsize
    o_isz = x_isz

    vmem_cap = _vmem_capacity_bytes()
    TN = _pick_tn(H, w_isz, vmem_cap)
    TB = _pick_tb(B)
    n_tiles = H // TN
    b_tiles = B // TB

    # Double-buffered tiles actually resident in VMEM + headroom for Mosaic
    # internal scratch.  No artificial floor; ~48 MiB cap keeps headroom on v7x.
    tiles_bytes = 2 * (TB * H * x_isz + H * TN * w_isz + TN * b_isz + TB * TN * o_isz)
    vmem_limit = int(min(48 * 1024 * 1024, tiles_bytes + (4 << 20)))

    # Weight streamed once, x re-read once per N tile (its block index changes
    # every grid step with the (N outer, batch inner) order), output written once.
    cost = pl.CostEstimate(
        flops=2 * B * H * H,
        transcendentals=B * H,
        bytes_accessed=(H * H * w_isz
                        + n_tiles * B * H * x_isz
                        + B * H * o_isz
                        + H * b_isz),
    )

    # Grid: (N tiles outer, batch tiles inner).  Weight/bias index_maps are
    # constant in the inner batch index, so each weight tile is DMA'd exactly
    # once.  The outer (N) axis is the "parallel" one: on v7x the two
    # TensorCores split the weight columns instead of duplicating the stream.
    return pl.pallas_call(
        _pooler_kernel,
        out_shape=jax.ShapeDtypeStruct((B, H), hidden_states.dtype),
        grid_spec=pltpu.PrefetchScalarGridSpec(
            num_scalar_prefetch=0,
            grid=(n_tiles, b_tiles),
            in_specs=[
                pl.BlockSpec((TB, H), lambda j, i: (i, 0)),   # x: full K, per-batch tile
                pl.BlockSpec((H, TN), lambda j, i: (0, j)),   # weight: per-N tile
                pl.BlockSpec((1, TN), lambda j, i: (0, j)),   # bias:   per-N tile
            ],
            out_specs=pl.BlockSpec((TB, TN), lambda j, i: (i, j)),
        ),
        compiler_params=pltpu.CompilerParams(
            dimension_semantics=("parallel", "arbitrary"),
            vmem_limit_bytes=vmem_limit,
        ),
        cost_estimate=cost,
    )(cls, weight, bias2d)


if __name__ == "__main__":
    batch, seq, hidden = 2, 8, 32
    key = jax.random.PRNGKey(0)
    k_x, k_w, k_b = jax.random.split(key, 3)

    hidden_states = jax.random.normal(k_x, (batch, seq, hidden), dtype=jnp.float32)
    # Same shapes as nn.Linear(hidden, hidden) but stored pre-transposed as
    # [H_in, H_out] (documented call-site contract).  For real models pass the
    # weight in bf16 to halve the HBM stream; here f32 keeps the check tight.
    weight = jax.random.normal(k_w, (hidden, hidden), dtype=jnp.float32) * 0.02
    bias = jax.random.normal(k_b, (hidden,), dtype=jnp.float32) * 0.02

    out = bert_pooler(hidden_states, weight, bias)
    out = jax.block_until_ready(out)

    # Reference check in plain JAX.
    ref = jnp.tanh(hidden_states[:, 0, :] @ weight + bias)
    assert out.shape == (batch, hidden)
    assert jnp.allclose(out, ref, atol=1e-5, rtol=1e-5)
    print("KERNEL_OK")
</pallas_src>

<mosaic_0001>
module attributes {stable_mosaic.version = 11 : i64} {
  func.func @_pooler_kernel(%arg0: i32, %arg1: i32, %arg2: memref<2x32xf32, #tpu.memory_space<vmem>>, %arg3: memref<32x32xf32, #tpu.memory_space<vmem>>, %arg4: memref<1x32xf32, #tpu.memory_space<vmem>>, %arg5: memref<2x32xf32, #tpu.memory_space<vmem>>) attributes {dimension_semantics = [#tpu.dimension_semantics<parallel>, #tpu.dimension_semantics<arbitrary>], iteration_bounds = array<i64: 1, 1>, scalar_prefetch = 0 : i64, scratch_operands = 0 : i64, tpu.core_type = #tpu.core_type<tc>, window_params = [{transform_indices = @transform_0, window_bounds = array<i64: 2, 32>}, {transform_indices = @transform_1, window_bounds = array<i64: 32, 32>}, {transform_indices = @transform_2, window_bounds = array<i64: 1, 32>}, {transform_indices = @transform_3, window_bounds = array<i64: 2, 32>}]} {
    %c0 = arith.constant 0 : index
    %c0_0 = arith.constant 0 : index
    %0 = vector.load %arg2[%c0, %c0_0] : memref<2x32xf32, #tpu.memory_space<vmem>>, vector<2x32xf32>
    %c0_1 = arith.constant 0 : index
    %c0_2 = arith.constant 0 : index
    %1 = vector.load %arg3[%c0_1, %c0_2] : memref<32x32xf32, #tpu.memory_space<vmem>>, vector<32x32xf32>
    %cst = arith.constant dense<0.000000e+00> : vector<2x32xf32>
    %2 = tpu.matmul %0, %1, %cst {dimension_numbers = #tpu.dot_dimension_numbers<[1], [0], [0], [1], [0, 0, 1, 1], [], []>} : vector<2x32xf32>, vector<32x32xf32>, vector<2x32xf32> -> vector<2x32xf32>
    %c0_3 = arith.constant 0 : index
    %c0_4 = arith.constant 0 : index
    %3 = vector.load %arg4[%c0_3, %c0_4] : memref<1x32xf32, #tpu.memory_space<vmem>>, vector<1x32xf32>
    %4 = vector.broadcast %3 : vector<1x32xf32> to vector<2x32xf32>
    %5 = arith.addf %2, %4 : vector<2x32xf32>
    %6 = math.tanh %5 : vector<2x32xf32>
    %c0_5 = arith.constant 0 : index
    %c0_6 = arith.constant 0 : index
    %7 = vector.load %arg5[%c0_5, %c0_6] : memref<2x32xf32, #tpu.memory_space<vmem>>, vector<2x32xf32>
    tpu.vector_store %arg5[%c0_5, %c0_6], %6 {strides = array<i32>} : memref<2x32xf32, #tpu.memory_space<vmem>>, vector<2x32xf32>,
    return
  }
  func.func @transform_0(%arg0: i32, %arg1: i32) -> (i32, i32) {
    %c0_i32 = arith.constant 0 : i32
    %c0_i32_0 = arith.constant 0 : i32
    return %arg1, %c0_i32 : i32, i32
  }
  func.func @transform_1(%arg0: i32, %arg1: i32) -> (i32, i32) {
    %c0_i32 = arith.constant 0 : i32
    %c0_i32_0 = arith.constant 0 : i32
    return %c0_i32, %arg0 : i32, i32
  }
  func.func @transform_2(%arg0: i32, %arg1: i32) -> (i32, i32) {
    %c0_i32 = arith.constant 0 : i32
    %c0_i32_0 = arith.constant 0 : i32
    return %c0_i32, %arg0 : i32, i32
  }
  func.func @transform_3(%arg0: i32, %arg1: i32) -> (i32, i32) {
    %c0_i32 = arith.constant 0 : i32
    return %arg1, %arg0 : i32, i32
  }
}

</mosaic_0001>

<llo_original>
// kernel: tpu_custom_call.1
$region0: #{tpu_custom_call.1}
  #allocation0 [shape = 'u32[]', space=smem, size = 0x4, offset = 0x4, fixed_abs, tag = 'smem constant byte address 0x4 - core index']
  #allocation1 [shape = 'u32[72,128]{1,0:T(1,128)}', space=vmem, size = 0x9000, scoped, tag = 'internal scratch']
  %s0 = inlined_call_operand.hbm [shape: f32[2,32], index: 0, kind: input, shape index: {}]
  %s1 = inlined_call_operand.hbm [shape: f32[32,32], index: 1, kind: input, shape index: {}]
  %s2 = inlined_call_operand.vmem [shape: f32[1,32], index: 2, kind: input, shape index: {}]
  %s3 = inlined_call_operand.hbm [shape: f32[2,32], index: 3, kind: output, shape index: {}]
  %s4 = sld [smem:[#allocation0]]
  $region30: #{tpu_custom_call.1} parent=0
    _
  %s6 = ssub.s32 1, %s4
  %s7 = scalar_select 0, %s6, %s4
  $region1: #{tpu_custom_call.1} parent=0
    #allocation2 [shape = 'u8[1024]{0}', space=vmem, size = 0x400, scoped, tag = 'input window, operand 0, single buffered']
    #allocation3 [shape = 's32[1]{0}', space=sflag, size = 0x4, scoped, tag = 'scoped memory for tpu_custom_call.1']
    #allocation4 [shape = 's32[1]{0}', space=sflag, size = 0x4, scoped, tag = 'scoped memory for tpu_custom_call.1']
    #allocation5 [shape = 'u8[16384]{0}', space=vmem, size = 0x4000, scoped, tag = 'input window, operand 1, single buffered']
    #allocation6 [shape = 's32[1]{0}', space=sflag, size = 0x4, scoped, tag = 'scoped memory for tpu_custom_call.1']
    #allocation7 [shape = 'u8[1024]{0}', space=vmem, size = 0x400, scoped, tag = 'output window, operand 0, single buffered']
    %8 = vsyncpa [#allocation3], 0
    %9 = vsyncpa [#allocation6], 0
    %10 = vsyncpa [#allocation4], 0
    // Predicated region
    $region2: #{tpu_custom_call.1} parent=1 // pred_check
      _
    $region3: #{tpu_custom_call.1} parent=1 // pred_check_branch
      %12 = sbr.rel (0) target = $region5
    $region4: #{tpu_custom_call.1} parent=1 // pred_region
      %14 = vsyncadd [#allocation3], 0
      %s16 = sshll.u32 %s0, 4
      %s17 = int_to_ptr.hbm [resolvable:$true] %s16
      %s18 = sshll.u32 [#allocation2], 4
      %s19 = int_to_ptr.vmem [resolvable:$true] %s18
      %21 = dma.hbm_to_vmem [thread:$0]  %s17, 32, %s19, [#allocation3]
    $region5: #{tpu_custom_call.1} parent=1 // pred_fallthru
      _
    // Predicated region
    $region6: #{tpu_custom_call.1} parent=1 // pred_check
      _
    $region7: #{tpu_custom_call.1} parent=1 // pred_check_branch
      %23 = sbr.rel (0) target = $region9
    $region8: #{tpu_custom_call.1} parent=1 // pred_region
      %25 = vsyncadd [#allocation6], 0
      %s26 = sshll.u32 %s1, 4
      %s27 = int_to_ptr.hbm [resolvable:$true] %s26
      %s28 = sshll.u32 [#allocation5], 4
      %s29 = int_to_ptr.vmem [resolvable:$true] %s28
      %34 = dma.hbm_to_vmem [thread:$0]  %s27, 512, %s29, [#allocation6], 128, 128, 8
    $region9: #{tpu_custom_call.1} parent=1 // pred_fallthru
      _
    // Predicated region
    $region10: #{tpu_custom_call.1} parent=1 // pred_check
      _
    $region11: #{tpu_custom_call.1} parent=1 // pred_check_branch
      %36 = sbr.rel (0) target = $region13
    $region12: #{tpu_custom_call.1} parent=1 // pred_region
      _
    $region13: #{tpu_custom_call.1} parent=1 // pred_fallthru
      _
    // Predicated region
    $region14: #{tpu_custom_call.1} parent=1 // pred_check
      _
    $region15: #{tpu_custom_call.1} parent=1 // pred_check_branch
      %38 = sbr.rel (0) target = $region17
    $region16: #{tpu_custom_call.1} parent=1 // pred_region
      %40 = dma.done [#allocation3], 32
    $region17: #{tpu_custom_call.1} parent=1 // pred_fallthru
      _
    // Predicated region
    $region18: #{tpu_custom_call.1} parent=1 // pred_check
      _
    $region19: #{tpu_custom_call.1} parent=1 // pred_check_branch
      %42 = sbr.rel (0) target = $region21
    $region20: #{tpu_custom_call.1} parent=1 // pred_region
      %44 = dma.done [#allocation6], 512
    $region21: #{tpu_custom_call.1} parent=1 // pred_fallthru
      _
    %v45 = vld [vmem:[#allocation2] sm:$0x3]
    %v46 = vld [vmem:[#allocation5] sm:$0xff]
    %v47 = vld [vmem:[#allocation5 + $0x8] sm:$0xff]
    %v48 = vld [vmem:[#allocation5 + $0x10] sm:$0xff]
    %v49 = vld [vmem:[#allocation5 + $0x18] sm:$0xff]
    %v50 = vld [vmem:[%s2] sm:$0x1]
    %v52 = vperm.slane %v50, 0
    %vm54 = vcmask 261120
    %v56 = vsel %vm54, %v45, 0
    %58 = vmatpush.msra.mxu0 0.0
    %59 = vmatpush.msra.mxu0 0.0
    %60 = vmatpush.msra.mxu0 0.0
    %61 = vmatpush.msra.mxu0 0.0
    %62 = vmatpush.msra.mxu0 0.0
    %63 = vmatpush.msra.mxu0 0.0
    %64 = vmatpush.msra.mxu0 0.0
    %65 = vmatpush.msra.mxu0 0.0
    %66 = vmatpush.msra.mxu0 0.0
    %67 = vmatpush.msra.mxu0 0.0
    %68 = vmatpush.msra.mxu0 0.0
    %69 = vmatpush.msra.mxu0 0.0
    %70 = vmatpush.msra.mxu0 %v49
    %71 = vmatpush.msra.mxu0 %v48
    %72 = vmatpush.msra.mxu0 %v47
    %73 = vmatpush.msra.mxu0 %v46
    %74 = vmatmul.f32.gmra.mxu0 %v56
    %v75 = vpop.f32.mrf.mxu0
    %v76 = vadd.f32 %v52, %v75
    %77 = vdwg.mxu0
    %v78 = vtanh.pop %v76
    %vm79 = vcmask 254976
    %80 = vst.msk [vmem:[#allocation7] sm:$0x3] %vm79, %v78
    // Predicated region
    $region22: #{tpu_custom_call.1} parent=1 // pred_check
      _
    $region23: #{tpu_custom_call.1} parent=1 // pred_check_branch
      %82 = sbr.rel (0) target = $region25
    $region24: #{tpu_custom_call.1} parent=1 // pred_region
      %84 = vsyncadd [#allocation4], 0
      %s86 = sshll.u32 [#allocation7], 4
      %s87 = int_to_ptr.vmem [resolvable:$true] %s86
      %s88 = sshll.u32 %s3, 4
      %s89 = int_to_ptr.hbm [resolvable:$true] %s88
      %91 = dma.vmem_to_hbm [thread:$0]  %s87, 32, %s89, [#allocation4]
    $region25: #{tpu_custom_call.1} parent=1 // pred_fallthru
      _
    // Predicated region
    $region26: #{tpu_custom_call.1} parent=1 // pred_check
      _
    $region27: #{tpu_custom_call.1} parent=1 // pred_check_branch
      %93 = sbr.rel (0) target = $region29
    $region28: #{tpu_custom_call.1} parent=1 // pred_region
      %95 = dma.done [#allocation4], 32
    $region29: #{tpu_custom_call.1} parent=1 // pred_fallthru
      _
    %96 = vsyncpa [#allocation3], 1
    %97 = vsyncpa [#allocation6], 1
    %98 = vsyncpa [#allocation4], 1

</llo_original>
